<compile_context>
chip_gen: v7x
topology: tpu7x:2x2x1
jax: 0.10.0
libtpu: 0.0.40
codegen_flags: <defaults>
</compile_context>

<pallas_src>
import functools
import math

import jax
import jax.numpy as jnp
from jax.experimental import pallas as pl
from jax.experimental.pallas import tpu as pltpu

_LANE = 128
_SUBLANE = 8
_TILE_ROWS = 1024            # (1024, 128) f32 tile = 512 KiB per buffer


# ----------------------------- kernels --------------------------------------


def _gumbel_train_kernel(x_ref, u_ref, o_ref, *, inv_temp):
    """Relaxed-Bernoulli reparameterized sample (training path)."""
    eps = 1e-6  # torch clamp_probs equivalent
    p = jnp.clip(x_ref[...].astype(jnp.float32), eps, 1.0 - eps)
    u = jnp.clip(u_ref[...], eps, 1.0 - eps)
    # logit(p) + logit(u) = log(p*u) - log((1-p)*(1-u))  (2 logs instead of 4)
    z = (jnp.log(p * u) - jnp.log((1.0 - p) * (1.0 - u))) * inv_temp
    # sigmoid(z) = 1 / (1 + exp(-z)); exp overflow -> inf -> result 0 (exact limit)
    o_ref[...] = (1.0 / (1.0 + jnp.exp(-z))).astype(o_ref.dtype)


def _threshold_eval_kernel(x_ref, o_ref, *, logit_threshold):
    """(sigmoid(x) >= t) == (x >= logit(t)); pure compare, no EUP work."""
    x = x_ref[...].astype(jnp.float32)
    o_ref[...] = (x >= logit_threshold).astype(o_ref.dtype)


# ----------------------------- wrappers --------------------------------------


def _round_up(a, b):
    return (a + b - 1) // b * b


def _to_slab(x):
    """Flatten to a lane-dense (rows, 128) slab (pads only when numel % 128 != 0)."""
    flat = x.reshape(-1)
    n = flat.shape[0]
    rows = pl.cdiv(n, _LANE)
    pad = rows * _LANE - n
    if pad:
        flat = jnp.pad(flat, (0, pad))
    return flat.reshape(rows, _LANE), n


def _from_slab(slab, n, shape):
    return slab.reshape(-1)[:n].reshape(shape)


def _row_tiling(rows):
    tile = min(_TILE_ROWS, _round_up(rows, _SUBLANE))
    return tile, pl.cdiv(rows, tile)


def gumbel_sigmoid_train(x, *, temp, key):
    slab, n = _to_slab(x)
    rows = slab.shape[0]
    tile, num_tiles = _row_tiling(rows)

    # Per-element uniform noise (same shape as the slab; pad lanes are discarded).
    u = jax.random.uniform(key, (rows, _LANE), dtype=jnp.float32)

    out = pl.pallas_call(
        functools.partial(_gumbel_train_kernel, inv_temp=1.0 / float(temp)),
        out_shape=jax.ShapeDtypeStruct((rows, _LANE), x.dtype),
        grid=(num_tiles,),
        in_specs=[
            pl.BlockSpec((tile, _LANE), lambda i: (i, 0)),
            pl.BlockSpec((tile, _LANE), lambda i: (i, 0)),
        ],
        out_specs=pl.BlockSpec((tile, _LANE), lambda i: (i, 0)),
        compiler_params=pltpu.CompilerParams(
            dimension_semantics=("parallel",)),
    )(slab, u)
    return _from_slab(out, n, x.shape)


def gumbel_sigmoid_eval(x, *, threshold):
    slab, n = _to_slab(x)
    rows = slab.shape[0]
    tile, num_tiles = _row_tiling(rows)
    logit_t = math.log(threshold / (1.0 - threshold))

    out = pl.pallas_call(
        functools.partial(_threshold_eval_kernel, logit_threshold=float(logit_t)),
        out_shape=jax.ShapeDtypeStruct((rows, _LANE), jnp.float32),  # torch .float()
        grid=(num_tiles,),
        in_specs=[pl.BlockSpec((tile, _LANE), lambda i: (i, 0))],
        out_specs=pl.BlockSpec((tile, _LANE), lambda i: (i, 0)),
        compiler_params=pltpu.CompilerParams(
            dimension_semantics=("parallel",)),
    )(slab)
    return _from_slab(out, n, x.shape)


class GumbelSigmoid:
    """JAX/Pallas port of the PyTorch GumbelSigmoid module (no parameters)."""

    def __init__(self, temp: float = 0.1, threshold: float = 0.5):
        self.temp = temp
        self.threshold = threshold
        self.training = True

    def __call__(self, x, seed=0):
        if self.training:
            return gumbel_sigmoid_train(
                x, temp=self.temp, key=jax.random.PRNGKey(seed))
        return gumbel_sigmoid_eval(x, threshold=self.threshold)


# TODO(synk): the rest of CoNAL.forward (backbone CNN, learned Linear/BatchNorm
# parameters, einsum crowd-kernel mixing) depends on external trained modules
# and is out of scope for this elementwise-gate kernel.


# ----------------------------- demo ------------------------------------------

if __name__ == "__main__":
    key = jax.random.PRNGKey(0)
    # input is interpreted as Bernoulli *probabilities* in training mode
    x = jax.random.uniform(key, (2, 4, 16, 16), dtype=jnp.float32,
                           minval=0.05, maxval=0.95)

    mod = GumbelSigmoid(temp=0.1, threshold=0.5)

    mod.training = True
    y_train = mod(x, seed=42)
    y_train = jax.block_until_ready(y_train)
    assert y_train.shape == x.shape
    assert y_train.dtype == x.dtype
    assert bool(jnp.all((y_train >= 0.0) & (y_train <= 1.0)))
    assert bool(jnp.all(jnp.isfinite(y_train)))

    mod.training = False
    y_eval = mod(x)
    y_eval = jax.block_until_ready(y_eval)
    assert y_eval.shape == x.shape
    # eval reference check: (sigmoid(x) >= 0.5).float()
    ref = (jax.nn.sigmoid(x) >= 0.5).astype(jnp.float32)
    assert bool(jnp.all(y_eval == ref))

    print("KERNEL_OK")
</pallas_src>

<mosaic_0001>
module attributes {stable_mosaic.version = 11 : i64} {
  func.func @_gumbel_train_kernel(%arg0: i32, %arg1: memref<16x128xf32, #tpu.memory_space<vmem>>, %arg2: memref<16x128xf32, #tpu.memory_space<vmem>>, %arg3: memref<16x128xf32, #tpu.memory_space<vmem>>) attributes {dimension_semantics = [#tpu.dimension_semantics<parallel>], iteration_bounds = array<i64: 1>, scalar_prefetch = 0 : i64, scratch_operands = 0 : i64, tpu.core_type = #tpu.core_type<tc>, window_params = [{transform_indices = @transform_0, window_bounds = array<i64: 16, 128>}, {transform_indices = @transform_1, window_bounds = array<i64: 16, 128>}, {transform_indices = @transform_2, window_bounds = array<i64: 16, 128>}]} {
    %c0 = arith.constant 0 : index
    %c0_0 = arith.constant 0 : index
    %0 = vector.load %arg1[%c0, %c0_0] : memref<16x128xf32, #tpu.memory_space<vmem>>, vector<16x128xf32>
    %cst = arith.constant 9.99999997E-7 : f32
    %cst_1 = arith.constant 0.999998986 : f32
    %1 = vector.broadcast %cst : f32 to vector<16x128xf32>
    %2 = arith.maximumf %1, %0 : vector<16x128xf32>
    %3 = vector.broadcast %cst_1 : f32 to vector<16x128xf32>
    %4 = arith.minimumf %3, %2 : vector<16x128xf32>
    %c0_2 = arith.constant 0 : index
    %c0_3 = arith.constant 0 : index
    %5 = vector.load %arg2[%c0_2, %c0_3] : memref<16x128xf32, #tpu.memory_space<vmem>>, vector<16x128xf32>
    %cst_4 = arith.constant 9.99999997E-7 : f32
    %cst_5 = arith.constant 0.999998986 : f32
    %6 = vector.broadcast %cst_4 : f32 to vector<16x128xf32>
    %7 = arith.maximumf %6, %5 : vector<16x128xf32>
    %8 = vector.broadcast %cst_5 : f32 to vector<16x128xf32>
    %9 = arith.minimumf %8, %7 : vector<16x128xf32>
    %10 = arith.mulf %4, %9 : vector<16x128xf32>
    %11 = math.log %10 : vector<16x128xf32>
    %cst_6 = arith.constant 1.000000e+00 : f32
    %12 = vector.broadcast %cst_6 : f32 to vector<16x128xf32>
    %13 = arith.subf %12, %4 : vector<16x128xf32>
    %cst_7 = arith.constant 1.000000e+00 : f32
    %14 = vector.broadcast %cst_7 : f32 to vector<16x128xf32>
    %15 = arith.subf %14, %9 : vector<16x128xf32>
    %16 = arith.mulf %13, %15 : vector<16x128xf32>
    %17 = math.log %16 : vector<16x128xf32>
    %18 = arith.subf %11, %17 : vector<16x128xf32>
    %cst_8 = arith.constant 1.000000e+01 : f32
    %19 = vector.broadcast %cst_8 : f32 to vector<16x128xf32>
    %20 = arith.mulf %18, %19 : vector<16x128xf32>
    %cst_9 = arith.constant 0.000000e+00 : f32
    %21 = vector.broadcast %cst_9 : f32 to vector<16x128xf32>
    %22 = arith.subf %21, %20 : vector<16x128xf32>
    %23 = math.exp %22 : vector<16x128xf32>
    %cst_10 = arith.constant 1.000000e+00 : f32
    %24 = vector.broadcast %cst_10 : f32 to vector<16x128xf32>
    %25 = arith.addf %24, %23 : vector<16x128xf32>
    %cst_11 = arith.constant 1.000000e+00 : f32
    %26 = vector.broadcast %cst_11 : f32 to vector<16x128xf32>
    %27 = arith.divf %26, %25 : vector<16x128xf32>
    %c0_12 = arith.constant 0 : index
    %c0_13 = arith.constant 0 : index
    %28 = vector.load %arg3[%c0_12, %c0_13] : memref<16x128xf32, #tpu.memory_space<vmem>>, vector<16x128xf32>
    tpu.vector_store %arg3[%c0_12, %c0_13], %27 {strides = array<i32>} : memref<16x128xf32, #tpu.memory_space<vmem>>, vector<16x128xf32>,
    return
  }
  func.func @transform_0(%arg0: i32) -> (i32, i32) {
    %c0_i32 = arith.constant 0 : i32
    %c0_i32_0 = arith.constant 0 : i32
    return %arg0, %c0_i32 : i32, i32
  }
  func.func @transform_1(%arg0: i32) -> (i32, i32) {
    %c0_i32 = arith.constant 0 : i32
    %c0_i32_0 = arith.constant 0 : i32
    return %arg0, %c0_i32 : i32, i32
  }
  func.func @transform_2(%arg0: i32) -> (i32, i32) {
    %c0_i32 = arith.constant 0 : i32
    %c0_i32_0 = arith.constant 0 : i32
    return %arg0, %c0_i32 : i32, i32
  }
}

</mosaic_0001>

<llo_original>
// kernel: tpu_custom_call.1
$region0: #{tpu_custom_call.1}
  #allocation0 [shape = 'u32[]', space=smem, size = 0x4, offset = 0x4, fixed_abs, tag = 'smem constant byte address 0x4 - core index']
  #allocation1 [shape = 'u32[144,128]{1,0:T(1,128)}', space=vmem, size = 0x12000, scoped, tag = 'internal scratch']
  %s0 = inlined_call_operand.hbm [shape: f32[16,128], index: 0, kind: input, shape index: {}]
  %s1 = inlined_call_operand.hbm [shape: f32[16,128], index: 1, kind: input, shape index: {}]
  %s2 = inlined_call_operand.hbm [shape: f32[16,128], index: 2, kind: output, shape index: {}]
  %s3 = sld [smem:[#allocation0]]
  $region26: #{tpu_custom_call.1} parent=0
    _
  %s5 = ssub.s32 1, %s3
  %s6 = scalar_select 0, %s5, %s3
  $region1: #{tpu_custom_call.1} parent=0
    #allocation2 [shape = 'u8[8192]{0}', space=vmem, size = 0x2000, scoped, tag = 'input window, operand 0, single buffered']
    #allocation3 [shape = 's32[1]{0}', space=sflag, size = 0x4, scoped, tag = 'scoped memory for tpu_custom_call.1']
    #allocation4 [shape = 's32[1]{0}', space=sflag, size = 0x4, scoped, tag = 'scoped memory for tpu_custom_call.1']
    #allocation5 [shape = 'u8[8192]{0}', space=vmem, size = 0x2000, scoped, tag = 'input window, operand 1, single buffered']
    #allocation6 [shape = 's32[1]{0}', space=sflag, size = 0x4, scoped, tag = 'scoped memory for tpu_custom_call.1']
    #allocation7 [shape = 'u8[8192]{0}', space=vmem, size = 0x2000, scoped, tag = 'output window, operand 0, single buffered']
    %7 = vsyncpa [#allocation3], 0
    %8 = vsyncpa [#allocation6], 0
    %9 = vsyncpa [#allocation4], 0
    // Predicated region
    $region2: #{tpu_custom_call.1} parent=1 // pred_check
      _
    $region3: #{tpu_custom_call.1} parent=1 // pred_check_branch
      %11 = sbr.rel (0) target = $region5
    $region4: #{tpu_custom_call.1} parent=1 // pred_region
      %s13 = ssub.s32 256, 256
      %14 = vsyncadd [#allocation3], %s13
      %s15 = sshll.u32 [#allocation2], 4
      %s16 = int_to_ptr.vmem [resolvable:$true] %s15
      %21 = dma.hbm_to_vmem [thread:$0]  %s0, 256, %s16, [#allocation3], 128, 128, 8
    $region5: #{tpu_custom_call.1} parent=1 // pred_fallthru
      _
    // Predicated region
    $region6: #{tpu_custom_call.1} parent=1 // pred_check
      _
    $region7: #{tpu_custom_call.1} parent=1 // pred_check_branch
      %23 = sbr.rel (0) target = $region9
    $region8: #{tpu_custom_call.1} parent=1 // pred_region
      %s25 = ssub.s32 256, 256
      %26 = vsyncadd [#allocation6], %s25
      %s27 = sshll.u32 [#allocation5], 4
      %s28 = int_to_ptr.vmem [resolvable:$true] %s27
      %33 = dma.hbm_to_vmem [thread:$0]  %s1, 256, %s28, [#allocation6], 128, 128, 8
    $region9: #{tpu_custom_call.1} parent=1 // pred_fallthru
      _
    // Predicated region
    $region10: #{tpu_custom_call.1} parent=1 // pred_check
      _
    $region11: #{tpu_custom_call.1} parent=1 // pred_check_branch
      %35 = sbr.rel (0) target = $region13
    $region12: #{tpu_custom_call.1} parent=1 // pred_region
      %36 = dma.done [#allocation3], 256
    $region13: #{tpu_custom_call.1} parent=1 // pred_fallthru
      _
    // Predicated region
    $region14: #{tpu_custom_call.1} parent=1 // pred_check
      _
    $region15: #{tpu_custom_call.1} parent=1 // pred_check_branch
      %38 = sbr.rel (0) target = $region17
    $region16: #{tpu_custom_call.1} parent=1 // pred_region
      %39 = dma.done [#allocation6], 256
    $region17: #{tpu_custom_call.1} parent=1 // pred_fallthru
      _
    %v40 = vld [vmem:[#allocation2] sm:$0xff]
    %v41 = vld [vmem:[#allocation2 + $0x8] sm:$0xff]
    %v42 = vmax.f32 %v40, 1e-06
    %v43 = vmax.f32 %v41, 1e-06
    %v44 = vmin.f32 %v42, 0.999999
    %v45 = vmin.f32 %v43, 0.999999
    %v46 = vld [vmem:[#allocation5] sm:$0xff]
    %v47 = vld [vmem:[#allocation5 + $0x8] sm:$0xff]
    %v48 = vmax.f32 %v46, 1e-06
    %v49 = vmax.f32 %v47, 1e-06
    %v50 = vmin.f32 %v48, 0.999999
    %v51 = vmin.f32 %v49, 0.999999
    %v52 = vmul.f32 %v44, %v50
    %v53 = vmul.f32 %v45, %v51
    %v54 = vlog2.pop %v52
    %v55 = vmul.f32 %v54, 0.6931472
    %v56 = vlog2.pop %v53
    %v57 = vmul.f32 %v56, 0.6931472
    %v58 = vsub.f32 1.0, %v44
    %v59 = vsub.f32 1.0, %v45
    %v60 = vsub.f32 1.0, %v50
    %v61 = vsub.f32 1.0, %v51
    %v62 = vmul.f32 %v58, %v60
    %v63 = vmul.f32 %v59, %v61
    %v64 = vlog2.pop %v62
    %v65 = vmul.f32 %v64, 0.6931472
    %v66 = vlog2.pop %v63
    %v67 = vmul.f32 %v66, 0.6931472
    %v68 = vsub.f32 %v55, %v65
    %v69 = vsub.f32 %v57, %v67
    %v70 = vmul.f32 %v68, 10.0
    %v71 = vmul.f32 %v69, 10.0
    %v72 = vsub.f32 0.0, %v70
    %v73 = vsub.f32 0.0, %v71
    %v74 = vmul.f32 %v72, 1.442695
    %v75 = vpow.pop %v74
    %v76 = vmul.f32 %v73, 1.442695
    %v77 = vpow.pop %v76
    %v78 = vadd.f32 %v75, 1.0
    %v79 = vadd.f32 %v77, 1.0
    %v80 = vrcp.pop %v78
    %v81 = vmul.f32 1.0, %v80
    %v82 = vrcp.pop %v79
    %v83 = vmul.f32 1.0, %v82
    %84 = vst [vmem:[#allocation7] sm:$0xff] %v81
    %85 = vst [vmem:[#allocation7 + $0x8] sm:$0xff] %v83
    // Predicated region
    $region18: #{tpu_custom_call.1} parent=1 // pred_check
      _
    $region19: #{tpu_custom_call.1} parent=1 // pred_check_branch
      %87 = sbr.rel (0) target = $region21
    $region20: #{tpu_custom_call.1} parent=1 // pred_region
      %s89 = ssub.s32 256, 256
      %90 = vsyncadd [#allocation4], %s89
      %s91 = sshll.u32 [#allocation7], 4
      %s92 = int_to_ptr.vmem [resolvable:$true] %s91
      %97 = dma.vmem_to_hbm [thread:$0]  %s92, 256, %s2, [#allocation4], 128, 128, 8
    $region21: #{tpu_custom_call.1} parent=1 // pred_fallthru
      _
    // Predicated region
    $region22: #{tpu_custom_call.1} parent=1 // pred_check
      _
    $region23: #{tpu_custom_call.1} parent=1 // pred_check_branch
      %99 = sbr.rel (0) target = $region25
    $region24: #{tpu_custom_call.1} parent=1 // pred_region
      %100 = dma.done [#allocation4], 256
    $region25: #{tpu_custom_call.1} parent=1 // pred_fallthru
      _
    %101 = vsyncpa [#allocation3], 1
    %102 = vsyncpa [#allocation6], 1
    %103 = vsyncpa [#allocation4], 1

</llo_original>
